<compile_context>
chip_gen: v7x
topology: tpu7x:2x2x1
jax: 0.10.0
libtpu: 0.0.40
codegen_flags: <defaults>
</compile_context>

<pallas_src>
import functools

import jax
import jax.numpy as jnp
import numpy as np
from jax import lax
from jax.experimental import pallas as pl
from jax.experimental.pallas import tpu as pltpu

# Transforms with a clean, self-contained definition (no custom torch ops):
_SUPPORTED_OPS = ("ablate", "binary-thresh", "flip-h", "flip-v", "invert", "scalar-multiply")
_FLIP_OPS = ("flip-h", "flip-v")


def _anti_identity(r, n):
    """(r, n, n) 0/1 exchange matrix J: J[b, i, j] = 1 iff i + j == n - 1 (built from iota)."""
    i = lax.broadcasted_iota(jnp.int32, (r, n, n), 1)
    j = lax.broadcasted_iota(jnp.int32, (r, n, n), 2)
    return (i + j == n - 1).astype(jnp.float32)


def _fused_kernel(x_ref, bits_ref, o_ref, *, chain, H, W):
    """One grid step == one block of channels.

    x_ref/o_ref block: (R, H, W) (flip path) or (R, H*W) (lane-dense elementwise path).
    bits_ref block: (R, 1, 1) / (R, 1) int32; bit j says whether chain op j touches that row.
    The whole transform chain is statically unrolled; the running value stays in vregs and
    the output is stored exactly once.
    """
    cur = x_ref[...].astype(jnp.float32)                      # running value, vreg-resident
    bits = jnp.broadcast_to(bits_ref[...], cur.shape)         # hoisted once (not per chain op)

    r = cur.shape[0]
    need_h = any(op == "flip-h" for op, _ in chain)
    need_v = any(op == "flip-v" for op, _ in chain)
    j_w = _anti_identity(r, W) if need_h else None            # hoisted out of the chain loop
    j_h = _anti_identity(r, H) if need_v else None

    for jop, (op, p0) in enumerate(chain):
        if op == "ablate":
            t = cur * jnp.float32(0.0)
        elif op == "binary-thresh":
            t = (cur > jnp.float32(p0)).astype(jnp.float32)
        elif op == "invert":
            t = jnp.float32(1.0) - cur
        elif op == "scalar-multiply":
            t = cur * jnp.float32(p0)
        elif op == "flip-h":
            # out[r,h,w] = cur[r,h,W-1-w]: exact 0/1 batched matmul, K = W (<= 128).
            t = jnp.einsum("rhw,rwv->rhv", cur, j_w, preferred_element_type=jnp.float32)
        elif op == "flip-v":
            # out[r,h,w] = cur[r,H-1-h,w]: exact 0/1 batched matmul, K = H (<= 128).
            t = jnp.einsum("rgh,rhw->rgw", j_h, cur, preferred_element_type=jnp.float32)
        else:  # pragma: no cover - filtered in the wrapper
            raise NotImplementedError(op)
        sel = (bits & (1 << jop)) != 0                        # per-row gate, branchless
        cur = jnp.where(sel, t, cur)

    o_ref[...] = cur.astype(o_ref.dtype)                      # single store of the block


def _pick_block_rows(C, row_elems, itemsize, need_mult8, budget_bytes=4 << 20):
    """Largest channel-block that fits the VMEM budget; whole tensor in one block if small."""
    row_bytes = row_elems * itemsize
    if C * row_bytes <= budget_bytes:
        return C                                              # single grid step (small problem)
    cands = [r for r in range(1, C + 1)
             if C % r == 0 and r * row_bytes <= budget_bytes
             and (not need_mult8 or r % 8 == 0)]
    return max(cands) if cands else C


def manipulation_layer_forward(x, layer_id, transforms_dict_list=None):
    """JAX/Pallas equivalent of ManipulationLayer.forward (NCHW, batch == 1)."""
    transforms_dict_list = transforms_dict_list or []
    N, C, H, W = x.shape
    assert N == 1, "ManipulationLayer semantics (squeeze/unsqueeze) require N == 1"

    chain = []   # (op_id, param0, indices) for transforms hitting this layer, in order
    for td in transforms_dict_list:
        if td["layer_id"] == -1:
            # TODO(synk): save_activations writes PNGs to disk (torchvision.utils);
            # no Pallas equivalent, intentionally skipped.
            pass
        if td["layer_id"] == layer_id:
            tid = td["transform_id"]
            if tid not in _SUPPORTED_OPS:
                # TODO(synk): erode/dilate/rotate/scale/translate/resize call custom
                # torch.ops.my_ops kernels whose semantics are not defined in-script.
                raise NotImplementedError(f"transform '{tid}' has no clean Pallas equivalent")
            p0 = float(td["params"][0]) if td["params"] else 0.0
            idx = tuple(sorted({int(i) for i in td["indices"] if 0 <= int(i) < C}))
            if idx:
                chain.append((tid, p0, idx))

    if not chain:
        return x
    assert len(chain) <= 31, "per-channel op bitmask is int32"

    # Per-channel int32 bitmask: bit j set <=> chain op j applies to that channel.
    bits_np = np.zeros((C,), np.int32)
    for j, (_, _, idx) in enumerate(chain):
        for i in idx:
            bits_np[i] |= (1 << j)

    HW = H * W
    has_flip = any(op in _FLIP_OPS for op, _, _ in chain)
    if has_flip:
        # 3-D layout keeps (H, W) explicit so flips stay factored K<=min(H,W) batched matmuls.
        xk = x.reshape(C, H, W)
        bits = jnp.asarray(bits_np.reshape(C, 1, 1))
        R = _pick_block_rows(C, HW, x.dtype.itemsize, need_mult8=False)
        x_block, bits_block, kshape = (R, H, W), (R, 1, 1), (C, H, W)
        idx_map = lambda i: (i, 0, 0)
    else:
        # Pure elementwise chain: lane-dense (C, H*W) layout (unmasked stores when HW % 128 == 0).
        xk = x.reshape(C, HW)
        bits = jnp.asarray(bits_np.reshape(C, 1))
        R = _pick_block_rows(C, HW, x.dtype.itemsize, need_mult8=True)
        x_block, bits_block, kshape = (R, HW), (R, 1), (C, HW)
        idx_map = lambda i: (i, 0)

    grid = (C // R,)
    kernel = functools.partial(
        _fused_kernel, chain=tuple((op, p0) for op, p0, _ in chain), H=H, W=W)

    out = pl.pallas_call(
        kernel,
        out_shape=jax.ShapeDtypeStruct(kshape, x.dtype),
        grid_spec=pl.GridSpec(
            grid=grid,
            in_specs=[pl.BlockSpec(x_block, idx_map),
                      pl.BlockSpec(bits_block, idx_map)],
            out_specs=pl.BlockSpec(x_block, idx_map),
        ),
        compiler_params=pltpu.CompilerParams(
            # Channels are independent; only worth splitting across v7x's two TCs once the
            # (now coarse) channel grid has enough steps to keep both busy.
            dimension_semantics=("parallel",) if grid[0] >= 4 else ("arbitrary",)),
    )(xk, bits)

    return out.reshape(N, C, H, W)


def _ref_forward(x_np, layer_id, transforms_dict_list):
    """Pure-numpy reference matching the PyTorch forward semantics."""
    out = np.array(x_np, copy=True)
    for td in transforms_dict_list:
        if td["layer_id"] != layer_id:
            continue
        tid, p, idx = td["transform_id"], td["params"], td["indices"]
        for i in idx:
            if not (0 <= i < out.shape[1]):
                continue
            d = out[0, i]
            if tid == "ablate":
                t = d * 0.0
            elif tid == "binary-thresh":
                t = (d > p[0]).astype(d.dtype)
            elif tid == "flip-h":
                t = d[:, ::-1]
            elif tid == "flip-v":
                t = d[::-1, :]
            elif tid == "invert":
                t = 1.0 - d
            elif tid == "scalar-multiply":
                t = d * p[0]
            else:
                raise NotImplementedError(tid)
            out[0, i] = t
    return out


if __name__ == "__main__":
    key = jax.random.PRNGKey(0)
    N, C, H, W = 1, 4, 16, 16   # module assumes batch == 1
    x = jax.random.normal(key, (N, C, H, W), dtype=jnp.float32)
    x_np = np.asarray(x)

    layer_id = 3
    transforms = [
        {"layer_id": 3, "transform_id": "invert",          "params": [],    "indices": [0, 2]},
        {"layer_id": 3, "transform_id": "scalar-multiply", "params": [0.5], "indices": [1]},
        {"layer_id": 3, "transform_id": "binary-thresh",   "params": [0.0], "indices": [2]},
        {"layer_id": 3, "transform_id": "flip-h",          "params": [],    "indices": [3]},
        {"layer_id": 3, "transform_id": "flip-v",          "params": [],    "indices": [0]},
        {"layer_id": 3, "transform_id": "ablate",          "params": [],    "indices": [1]},
        {"layer_id": 5, "transform_id": "invert",          "params": [],    "indices": [0]},  # other layer: no-op
    ]
    out = jax.block_until_ready(manipulation_layer_forward(x, layer_id, transforms))
    np.testing.assert_allclose(np.asarray(out), _ref_forward(x_np, layer_id, transforms),
                               rtol=1e-5, atol=1e-5)

    # Also exercise the flip-free, lane-dense (C, H*W) path.
    transforms_ew = [
        {"layer_id": 3, "transform_id": "invert",          "params": [],    "indices": [1, 3]},
        {"layer_id": 3, "transform_id": "scalar-multiply", "params": [2.0], "indices": [0, 1]},
        {"layer_id": 3, "transform_id": "ablate",          "params": [],    "indices": [2]},
    ]
    out2 = jax.block_until_ready(manipulation_layer_forward(x, layer_id, transforms_ew))
    np.testing.assert_allclose(np.asarray(out2), _ref_forward(x_np, layer_id, transforms_ew),
                               rtol=1e-5, atol=1e-5)

    print("KERNEL_OK")
</pallas_src>

<mosaic_0001>
module attributes {stable_mosaic.version = 11 : i64} {
  func.func @_fused_kernel(%arg0: i32, %arg1: memref<4x16x16xf32, #tpu.memory_space<vmem>>, %arg2: memref<4x1x1xi32, #tpu.memory_space<vmem>>, %arg3: memref<4x16x16xf32, #tpu.memory_space<vmem>>) attributes {dimension_semantics = [#tpu.dimension_semantics<arbitrary>], iteration_bounds = array<i64: 1>, scalar_prefetch = 0 : i64, scratch_operands = 0 : i64, tpu.core_type = #tpu.core_type<tc>, window_params = [{transform_indices = @transform_0, window_bounds = array<i64: 4, 16, 16>}, {transform_indices = @transform_1, window_bounds = array<i64: 4, 1, 1>}, {transform_indices = @transform_2, window_bounds = array<i64: 4, 16, 16>}]} {
    %c0 = arith.constant 0 : index
    %c0_0 = arith.constant 0 : index
    %c0_1 = arith.constant 0 : index
    %0 = vector.load %arg1[%c0, %c0_0, %c0_1] : memref<4x16x16xf32, #tpu.memory_space<vmem>>, vector<4x16x16xf32>
    %c0_2 = arith.constant 0 : index
    %c0_3 = arith.constant 0 : index
    %c0_4 = arith.constant 0 : index
    %1 = vector.load %arg2[%c0_2, %c0_3, %c0_4] : memref<4x1x1xi32, #tpu.memory_space<vmem>>, vector<4x1x1xi32>
    %2 = vector.shape_cast %1 : vector<4x1x1xi32> to vector<4x1x1xi32>
    %3 = vector.broadcast %2 : vector<4x1x1xi32> to vector<4x16x16xi32>
    %4 = tpu.iota {dimensions = array<i32: 1>} : vector<4x16x16xi32>
    %5 = tpu.iota {dimensions = array<i32: 2>} : vector<4x16x16xi32>
    %6 = arith.addi %4, %5 : vector<4x16x16xi32>
    %c15_i32 = arith.constant 15 : i32
    %7 = vector.broadcast %c15_i32 : i32 to vector<4x16x16xi32>
    %8 = arith.cmpi eq, %6, %7 : vector<4x16x16xi32>
    %9 = arith.extui %8 : vector<4x16x16xi1> to vector<4x16x16xi32>
    %10 = arith.sitofp %9 : vector<4x16x16xi32> to vector<4x16x16xf32>
    %11 = tpu.iota {dimensions = array<i32: 1>} : vector<4x16x16xi32>
    %12 = tpu.iota {dimensions = array<i32: 2>} : vector<4x16x16xi32>
    %13 = arith.addi %11, %12 : vector<4x16x16xi32>
    %c15_i32_5 = arith.constant 15 : i32
    %14 = vector.broadcast %c15_i32_5 : i32 to vector<4x16x16xi32>
    %15 = arith.cmpi eq, %13, %14 : vector<4x16x16xi32>
    %16 = arith.extui %15 : vector<4x16x16xi1> to vector<4x16x16xi32>
    %17 = arith.sitofp %16 : vector<4x16x16xi32> to vector<4x16x16xf32>
    %cst = arith.constant 1.000000e+00 : f32
    %18 = vector.broadcast %cst : f32 to vector<4x16x16xf32>
    %19 = arith.subf %18, %0 : vector<4x16x16xf32>
    %c1_i32 = arith.constant 1 : i32
    %20 = vector.broadcast %c1_i32 : i32 to vector<4x16x16xi32>
    %21 = arith.andi %3, %20 : vector<4x16x16xi32>
    %c0_i32 = arith.constant 0 : i32
    %22 = vector.broadcast %c0_i32 : i32 to vector<4x16x16xi32>
    %23 = arith.cmpi ne, %21, %22 : vector<4x16x16xi32>
    %24 = arith.select %23, %19, %0 : vector<4x16x16xi1>, vector<4x16x16xf32>
    %cst_6 = arith.constant 5.000000e-01 : f32
    %25 = vector.broadcast %cst_6 : f32 to vector<4x16x16xf32>
    %26 = arith.mulf %24, %25 : vector<4x16x16xf32>
    %c2_i32 = arith.constant 2 : i32
    %27 = vector.broadcast %c2_i32 : i32 to vector<4x16x16xi32>
    %28 = arith.andi %3, %27 : vector<4x16x16xi32>
    %c0_i32_7 = arith.constant 0 : i32
    %29 = vector.broadcast %c0_i32_7 : i32 to vector<4x16x16xi32>
    %30 = arith.cmpi ne, %28, %29 : vector<4x16x16xi32>
    %31 = arith.select %30, %26, %24 : vector<4x16x16xi1>, vector<4x16x16xf32>
    %cst_8 = arith.constant 0.000000e+00 : f32
    %32 = vector.broadcast %cst_8 : f32 to vector<4x16x16xf32>
    %33 = arith.cmpf ogt, %31, %32 : vector<4x16x16xf32>
    %34 = arith.extui %33 : vector<4x16x16xi1> to vector<4x16x16xi32>
    %35 = arith.sitofp %34 : vector<4x16x16xi32> to vector<4x16x16xf32>
    %c4_i32 = arith.constant 4 : i32
    %36 = vector.broadcast %c4_i32 : i32 to vector<4x16x16xi32>
    %37 = arith.andi %3, %36 : vector<4x16x16xi32>
    %c0_i32_9 = arith.constant 0 : i32
    %38 = vector.broadcast %c0_i32_9 : i32 to vector<4x16x16xi32>
    %39 = arith.cmpi ne, %37, %38 : vector<4x16x16xi32>
    %40 = arith.select %39, %35, %31 : vector<4x16x16xi1>, vector<4x16x16xf32>
    "tpu.trace_start"() <{level = 10 : i32, message = "rhw,rwv->rhv"}> : () -> ()
    %cst_10 = arith.constant dense<0.000000e+00> : vector<4x16x16xf32>
    %41 = tpu.matmul %40, %10, %cst_10 {dimension_numbers = #tpu.dot_dimension_numbers<[2], [1], [1], [2], [0, 0, 0, 1, 1, 2], [0], [0]>} : vector<4x16x16xf32>, vector<4x16x16xf32>, vector<4x16x16xf32> -> vector<4x16x16xf32>
    "tpu.trace_stop"() : () -> ()
    %c8_i32 = arith.constant 8 : i32
    %42 = vector.broadcast %c8_i32 : i32 to vector<4x16x16xi32>
    %43 = arith.andi %3, %42 : vector<4x16x16xi32>
    %c0_i32_11 = arith.constant 0 : i32
    %44 = vector.broadcast %c0_i32_11 : i32 to vector<4x16x16xi32>
    %45 = arith.cmpi ne, %43, %44 : vector<4x16x16xi32>
    %46 = arith.select %45, %41, %40 : vector<4x16x16xi1>, vector<4x16x16xf32>
    "tpu.trace_start"() <{level = 10 : i32, message = "rgh,rhw->rgw"}> : () -> ()
    %cst_12 = arith.constant dense<0.000000e+00> : vector<4x16x16xf32>
    %47 = tpu.matmul %17, %46, %cst_12 {dimension_numbers = #tpu.dot_dimension_numbers<[2], [1], [1], [2], [0, 0, 0, 1, 1, 2], [0], [0]>} : vector<4x16x16xf32>, vector<4x16x16xf32>, vector<4x16x16xf32> -> vector<4x16x16xf32>
    "tpu.trace_stop"() : () -> ()
    %c16_i32 = arith.constant 16 : i32
    %48 = vector.broadcast %c16_i32 : i32 to vector<4x16x16xi32>
    %49 = arith.andi %3, %48 : vector<4x16x16xi32>
    %c0_i32_13 = arith.constant 0 : i32
    %50 = vector.broadcast %c0_i32_13 : i32 to vector<4x16x16xi32>
    %51 = arith.cmpi ne, %49, %50 : vector<4x16x16xi32>
    %52 = arith.select %51, %47, %46 : vector<4x16x16xi1>, vector<4x16x16xf32>
    %cst_14 = arith.constant 0.000000e+00 : f32
    %53 = vector.broadcast %cst_14 : f32 to vector<4x16x16xf32>
    %54 = arith.mulf %52, %53 : vector<4x16x16xf32>
    %c32_i32 = arith.constant 32 : i32
    %55 = vector.broadcast %c32_i32 : i32 to vector<4x16x16xi32>
    %56 = arith.andi %3, %55 : vector<4x16x16xi32>
    %c0_i32_15 = arith.constant 0 : i32
    %57 = vector.broadcast %c0_i32_15 : i32 to vector<4x16x16xi32>
    %58 = arith.cmpi ne, %56, %57 : vector<4x16x16xi32>
    %59 = arith.select %58, %54, %52 : vector<4x16x16xi1>, vector<4x16x16xf32>
    %c0_16 = arith.constant 0 : index
    %c0_17 = arith.constant 0 : index
    %c0_18 = arith.constant 0 : index
    %60 = vector.load %arg3[%c0_16, %c0_17, %c0_18] : memref<4x16x16xf32, #tpu.memory_space<vmem>>, vector<4x16x16xf32>
    tpu.vector_store %arg3[%c0_16, %c0_17, %c0_18], %59 {strides = array<i32>} : memref<4x16x16xf32, #tpu.memory_space<vmem>>, vector<4x16x16xf32>,
    return
  }
  func.func @transform_0(%arg0: i32) -> (i32, i32, i32) {
    %c0_i32 = arith.constant 0 : i32
    %c0_i32_0 = arith.constant 0 : i32
    %c0_i32_1 = arith.constant 0 : i32
    return %arg0, %c0_i32, %c0_i32_0 : i32, i32, i32
  }
  func.func @transform_1(%arg0: i32) -> (i32, i32, i32) {
    %c0_i32 = arith.constant 0 : i32
    %c0_i32_0 = arith.constant 0 : i32
    %c0_i32_1 = arith.constant 0 : i32
    return %arg0, %c0_i32, %c0_i32_0 : i32, i32, i32
  }
  func.func @transform_2(%arg0: i32) -> (i32, i32, i32) {
    %c0_i32 = arith.constant 0 : i32
    %c0_i32_0 = arith.constant 0 : i32
    %c0_i32_1 = arith.constant 0 : i32
    return %arg0, %c0_i32, %c0_i32_0 : i32, i32, i32
  }
}

</mosaic_0001>

<llo_original>
// kernel: tpu_custom_call.1
$region0: #{tpu_custom_call.1}
  #allocation0 [shape = 'u32[]', space=smem, size = 0x4, offset = 0x4, fixed_abs, tag = 'smem constant byte address 0x4 - core index']
  #allocation1 [shape = 'u32[144,128]{1,0:T(1,128)}', space=vmem, size = 0x12000, scoped, tag = 'internal scratch']
  %s0 = inlined_call_operand.hbm [shape: f32[4,16,16], index: 0, kind: input, shape index: {}]
  %s1 = inlined_call_operand.vmem [shape: s32[4,1,1], index: 1, kind: input, shape index: {}]
  %s2 = inlined_call_operand.hbm [shape: f32[4,16,16], index: 2, kind: output, shape index: {}]
  %s3 = sld [smem:[#allocation0]]
  $region22: #{tpu_custom_call.1} parent=0
    _
  %s5 = ssub.s32 1, %s3
  %s6 = scalar_select 0, %s5, %s3
  $region1: #{tpu_custom_call.1} parent=0
    #allocation2 [shape = 'u8[32768]{0}', space=vmem, size = 0x8000, scoped, tag = 'input window, operand 0, single buffered']
    #allocation3 [shape = 's32[1]{0}', space=sflag, size = 0x4, scoped, tag = 'scoped memory for tpu_custom_call.1']
    #allocation4 [shape = 's32[1]{0}', space=sflag, size = 0x4, scoped, tag = 'scoped memory for tpu_custom_call.1']
    #allocation5 [shape = 'u8[32768]{0}', space=vmem, size = 0x8000, scoped, tag = 'output window, operand 0, single buffered']
    %7 = vsyncpa [#allocation3], 0
    %8 = vsyncpa [#allocation4], 0
    // Predicated region
    $region2: #{tpu_custom_call.1} parent=1 // pred_check
      _
    $region3: #{tpu_custom_call.1} parent=1 // pred_check_branch
      %10 = sbr.rel (0) target = $region5
    $region4: #{tpu_custom_call.1} parent=1 // pred_region
      %s12 = ssub.s32 1024, 1024
      %13 = vsyncadd [#allocation3], %s12
      %s14 = sshll.u32 [#allocation2], 4
      %s15 = int_to_ptr.vmem [resolvable:$true] %s14
      %20 = dma.hbm_to_vmem [thread:$0]  %s0, 1024, %s15, [#allocation3], 128, 128, 8
    $region5: #{tpu_custom_call.1} parent=1 // pred_fallthru
      _
    // Predicated region
    $region6: #{tpu_custom_call.1} parent=1 // pred_check
      _
    $region7: #{tpu_custom_call.1} parent=1 // pred_check_branch
      %22 = sbr.rel (0) target = $region9
    $region8: #{tpu_custom_call.1} parent=1 // pred_region
      _
    $region9: #{tpu_custom_call.1} parent=1 // pred_fallthru
      _
    // Predicated region
    $region10: #{tpu_custom_call.1} parent=1 // pred_check
      _
    $region11: #{tpu_custom_call.1} parent=1 // pred_check_branch
      %24 = sbr.rel (0) target = $region13
    $region12: #{tpu_custom_call.1} parent=1 // pred_region
      %25 = dma.done [#allocation3], 1024
    $region13: #{tpu_custom_call.1} parent=1 // pred_fallthru
      _
    %v26 = vld [vmem:[#allocation2] sm:$0xff]
    %v27 = vld [vmem:[#allocation2 + $0x8] sm:$0xff]
    %v28 = vld [vmem:[#allocation2 + $0x10] sm:$0xff]
    %v29 = vld [vmem:[#allocation2 + $0x18] sm:$0xff]
    %v30 = vld [vmem:[#allocation2 + $0x20] sm:$0xff]
    %v31 = vld [vmem:[#allocation2 + $0x28] sm:$0xff]
    %v32 = vld [vmem:[#allocation2 + $0x30] sm:$0xff]
    %v33 = vld [vmem:[#allocation2 + $0x38] sm:$0xff]
    %v34 = vld [vmem:[%s1] sm:$0x1]
    %v35 = vld [vmem:[%s1 + $0x1] sm:$0x1]
    %v36 = vld [vmem:[%s1 + $0x2] sm:$0x1]
    %v37 = vld [vmem:[%s1 + $0x3] sm:$0x1]
    %v38 = vlaneseq
    %v39 = vshrl.u32 %v38, 7
    %v40 = vsub.s32 0, %v39
    %v41 = vrot.slane %v34, %v40
    %v42 = vlaneseq
    %v43 = vshrl.u32 %v42, 7
    %v44 = vsub.s32 0, %v43
    %v45 = vrot.slane %v35, %v44
    %v46 = vlaneseq
    %v47 = vshrl.u32 %v46, 7
    %v48 = vsub.s32 0, %v47
    %v49 = vrot.slane %v36, %v48
    %v50 = vlaneseq
    %v51 = vshrl.u32 %v50, 7
    %v52 = vsub.s32 0, %v51
    %v53 = vrot.slane %v37, %v52
    %54 = vset.pattern.permute.xlu0 0
    %55 = vperm.xlu0 %54, %v41
    %v56 = vpop.permute.xlu0 %55
    %57 = vset.pattern.permute.xlu0 0
    %58 = vperm.xlu0 %57, %v45
    %v59 = vpop.permute.xlu0 %58
    %60 = vset.pattern.permute.xlu0 0
    %61 = vperm.xlu0 %60, %v49
    %v62 = vpop.permute.xlu0 %61
    %63 = vset.pattern.permute.xlu0 0
    %64 = vperm.xlu0 %63, %v53
    %v65 = vpop.permute.xlu0 %64
    %v66 = vlaneseq
    %v67 = vshrl.u32 %v66, 7
    %v68 = vadd.s32 %v67, 8
    %v69 = vlaneseq
    %v70 = vand.u32 %v69, 127
    %v71 = vadd.s32 %v67, %v70
    %v72 = vadd.s32 %v68, %v70
    %vm73 = vcmp.eq.s32.totalorder %v71, 15
    %vm74 = vcmp.eq.s32.totalorder %v72, 15
    %v75 = vsel %vm73, 1, 0
    %v76 = vsel %vm74, 1, 0
    %v77 = vcvt.s32.f32 %v75
    %v78 = vcvt.s32.f32 %v76
    %v79 = vsub.f32 1.0, %v26
    %v80 = vsub.f32 1.0, %v27
    %v81 = vsub.f32 1.0, %v28
    %v82 = vsub.f32 1.0, %v29
    %v83 = vsub.f32 1.0, %v30
    %v84 = vsub.f32 1.0, %v31
    %v85 = vsub.f32 1.0, %v32
    %v86 = vsub.f32 1.0, %v33
    %v87 = vand.u32 %v56, 1
    %v88 = vand.u32 %v59, 1
    %v89 = vand.u32 %v62, 1
    %v90 = vand.u32 %v65, 1
    %vm91 = vcmp.ne.s32.totalorder %v87, 0
    %vm92 = vcmp.ne.s32.totalorder %v88, 0
    %vm93 = vcmp.ne.s32.totalorder %v89, 0
    %vm94 = vcmp.ne.s32.totalorder %v90, 0
    %v95 = vsel %vm91, %v79, %v26
    %v96 = vsel %vm91, %v80, %v27
    %v97 = vsel %vm92, %v81, %v28
    %v98 = vsel %vm92, %v82, %v29
    %v99 = vsel %vm93, %v83, %v30
    %v100 = vsel %vm93, %v84, %v31
    %v101 = vsel %vm94, %v85, %v32
    %v102 = vsel %vm94, %v86, %v33
    %v103 = vmul.f32 %v95, 0.5
    %v104 = vmul.f32 %v96, 0.5
    %v105 = vmul.f32 %v97, 0.5
    %v106 = vmul.f32 %v98, 0.5
    %v107 = vmul.f32 %v99, 0.5
    %v108 = vmul.f32 %v100, 0.5
    %v109 = vmul.f32 %v101, 0.5
    %v110 = vmul.f32 %v102, 0.5
    %v111 = vand.u32 %v56, 2
    %v112 = vand.u32 %v59, 2
    %v113 = vand.u32 %v62, 2
    %v114 = vand.u32 %v65, 2
    %vm115 = vcmp.ne.s32.totalorder %v111, 0
    %vm116 = vcmp.ne.s32.totalorder %v112, 0
    %vm117 = vcmp.ne.s32.totalorder %v113, 0
    %vm118 = vcmp.ne.s32.totalorder %v114, 0
    %v119 = vsel %vm115, %v103, %v95
    %v120 = vsel %vm115, %v104, %v96
    %v121 = vsel %vm116, %v105, %v97
    %v122 = vsel %vm116, %v106, %v98
    %v123 = vsel %vm117, %v107, %v99
    %v124 = vsel %vm117, %v108, %v100
    %v125 = vsel %vm118, %v109, %v101
    %v126 = vsel %vm118, %v110, %v102
    %vm127 = vcmp.gt.f32.partialorder %v119, 0.0
    %vm128 = vcmp.gt.f32.partialorder %v120, 0.0
    %vm129 = vcmp.gt.f32.partialorder %v121, 0.0
    %vm130 = vcmp.gt.f32.partialorder %v122, 0.0
    %vm131 = vcmp.gt.f32.partialorder %v123, 0.0
    %vm132 = vcmp.gt.f32.partialorder %v124, 0.0
    %vm133 = vcmp.gt.f32.partialorder %v125, 0.0
    %vm134 = vcmp.gt.f32.partialorder %v126, 0.0
    %v135 = vsel %vm127, 1, 0
    %v136 = vsel %vm128, 1, 0
    %v137 = vsel %vm129, 1, 0
    %v138 = vsel %vm130, 1, 0
    %v139 = vsel %vm131, 1, 0
    %v140 = vsel %vm132, 1, 0
    %v141 = vsel %vm133, 1, 0
    %v142 = vsel %vm134, 1, 0
    %v143 = vcvt.s32.f32 %v135
    %v144 = vcvt.s32.f32 %v136
    %v145 = vcvt.s32.f32 %v137
    %v146 = vcvt.s32.f32 %v138
    %v147 = vcvt.s32.f32 %v139
    %v148 = vcvt.s32.f32 %v140
    %v149 = vcvt.s32.f32 %v141
    %v150 = vcvt.s32.f32 %v142
    %v151 = vand.u32 %v56, 4
    %v152 = vand.u32 %v59, 4
    %v153 = vand.u32 %v62, 4
    %v154 = vand.u32 %v65, 4
    %vm155 = vcmp.ne.s32.totalorder %v151, 0
    %vm156 = vcmp.ne.s32.totalorder %v152, 0
    %vm157 = vcmp.ne.s32.totalorder %v153, 0
    %vm158 = vcmp.ne.s32.totalorder %v154, 0
    %v159 = vsel %vm155, %v143, %v119
    %v160 = vsel %vm155, %v144, %v120
    %v161 = vsel %vm156, %v145, %v121
    %v162 = vsel %vm156, %v146, %v122
    %v163 = vsel %vm157, %v147, %v123
    %v164 = vsel %vm157, %v148, %v124
    %v165 = vsel %vm158, %v149, %v125
    %v166 = vsel %vm158, %v150, %v126
    %vm167 = vcmask 130048
    %v169 = vsel %vm167, %v159, 0
    %v172 = vsel %vm167, %v160, 0
    %174 = vmatprep.subr.mxu0 0.0
    %175 = vmatpush1.msra.mxu0 %v77
    %176 = vmatprep.subr.mxu0 0.0
    %177 = vmatpush1.msra.mxu0 %v78
    %178 = vmatprep.subr.mxu0 0.0
    %179 = vmatpush1.msra.mxu0 0.0
    %180 = vmatprep.subr.mxu0 0.0
    %181 = vmatpush1.msra.mxu0 0.0
    %182 = vmatprep.subr.mxu0 0.0
    %183 = vmatpush1.msra.mxu0 0.0
    %184 = vmatprep.subr.mxu0 0.0
    %185 = vmatpush1.msra.mxu0 0.0
    %186 = vmatprep.subr.mxu0 0.0
    %187 = vmatpush1.msra.mxu0 0.0
    %188 = vmatprep.subr.mxu0 0.0
    %189 = vmatpush1.msra.mxu0 0.0
    %190 = vmatprep.subr.mxu0 0.0
    %191 = vmatpush1.msra.mxu0 0.0
    %192 = vmatprep.subr.mxu0 0.0
    %193 = vmatpush1.msra.mxu0 0.0
    %194 = vmatprep.subr.mxu0 0.0
    %195 = vmatpush1.msra.mxu0 0.0
    %196 = vmatprep.subr.mxu0 0.0
    %197 = vmatpush1.msra.mxu0 0.0
    %198 = vmatprep.subr.mxu0 0.0
    %199 = vmatpush1.msra.mxu0 0.0
    %200 = vmatprep.subr.mxu0 0.0
    %201 = vmatpush1.msra.mxu0 0.0
    %202 = vmatprep.subr.mxu0 0.0
    %203 = vmatpush1.msra.mxu0 0.0
    %204 = vmatprep.subr.mxu0 0.0
    %205 = vmatpush1.msra.mxu0 0.0
    %206 = vmatprep.subr.mxu0 0.0
    %207 = vmatpush1.msra.mxu0 0.0
    %208 = vmatprep.subr.mxu0 0.0
    %209 = vmatpush1.msra.mxu0 0.0
    %210 = vmatprep.subr.mxu0 0.0
    %211 = vmatpush1.msra.mxu0 0.0
    %212 = vmatprep.subr.mxu0 0.0
    %213 = vmatpush1.msra.mxu0 0.0
    %214 = vmatprep.subr.mxu0 0.0
    %215 = vmatpush1.msra.mxu0 0.0
    %216 = vmatprep.subr.mxu0 0.0
    %217 = vmatpush1.msra.mxu0 0.0
    %218 = vmatprep.subr.mxu0 0.0
    %219 = vmatpush1.msra.mxu0 0.0
    %220 = vmatprep.subr.mxu0 0.0
    %221 = vmatpush1.msra.mxu0 0.0
    %222 = vmatprep.subr.mxu0 0.0
    %223 = vmatpush1.msra.mxu0 0.0
    %224 = vmatprep.subr.mxu0 0.0
    %225 = vmatpush1.msra.mxu0 0.0
    %226 = vmatprep.subr.mxu0 0.0
    %227 = vmatpush1.msra.mxu0 0.0
    %228 = vmatprep.subr.mxu0 0.0
    %229 = vmatpush1.msra.mxu0 0.0
    %230 = vmatprep.subr.mxu0 0.0
    %231 = vmatpush1.msra.mxu0 0.0
    %232 = vmatprep.subr.mxu0 0.0
    %233 = vmatpush1.msra.mxu0 0.0
    %234 = vmatprep.subr.mxu0 0.0
    %235 = vmatpush1.msra.mxu0 0.0
    %236 = vmatprep.subr.mxu0 0.0
    %237 = vmatpush1.msra.mxu0 0.0
    %238 = vmatprep.mubr.f32.mxu0 0.0
    %239 = vmatmul.mubr.f32.gmra.mrb[0].mxu0 %v169
    %v240 = vpop.f32.mrb[0].mxu0
    %v241 = vadd.f32 0.0, %v240
    %v242 = vpop.f32.mrb[0].mxu0
    %243 = vmatprep.mubr.f32.mxu0 0.0
    %244 = vmatmul.mubr.f32.gmra.mrb[0].mxu0 %v172
    %v245 = vpop.f32.mrb[0].mxu0
    %v246 = vadd.f32 0.0, %v245
    %v247 = vpop.f32.mrb[0].mxu0
    %248 = vdwg.mxu0
    %v250 = vsel %vm167, %v161, 0
    %v253 = vsel %vm167, %v162, 0
    %255 = vmatprep.subr.mxu0 0.0
    %256 = vmatpush1.msra.mxu0 %v77
    %257 = vmatprep.subr.mxu0 0.0
    %258 = vmatpush1.msra.mxu0 %v78
    %259 = vmatprep.subr.mxu0 0.0
    %260 = vmatpush1.msra.mxu0 0.0
    %261 = vmatprep.subr.mxu0 0.0
    %262 = vmatpush1.msra.mxu0 0.0
    %263 = vmatprep.subr.mxu0 0.0
    %264 = vmatpush1.msra.mxu0 0.0
    %265 = vmatprep.subr.mxu0 0.0
    %266 = vmatpush1.msra.mxu0 0.0
    %267 = vmatprep.subr.mxu0 0.0
    %268 = vmatpush1.msra.mxu0 0.0
    %269 = vmatprep.subr.mxu0 0.0
    %270 = vmatpush1.msra.mxu0 0.0
    %271 = vmatprep.subr.mxu0 0.0
    %272 = vmatpush1.msra.mxu0 0.0
    %273 = vmatprep.subr.mxu0 0.0
    %274 = vmatpush1.msra.mxu0 0.0
    %275 = vmatprep.subr.mxu0 0.0
    %276 = vmatpush1.msra.mxu0 0.0
    %277 = vmatprep.subr.mxu0 0.0
    %278 = vmatpush1.msra.mxu0 0.0
    %279 = vmatprep.subr.mxu0 0.0
    %280 = vmatpush1.msra.mxu0 0.0
    %281 = vmatprep.subr.mxu0 0.0
    %282 = vmatpush1.msra.mxu0 0.0
    %283 = vmatprep.subr.mxu0 0.0
    %284 = vmatpush1.msra.mxu0 0.0
    %285 = vmatprep.subr.mxu0 0.0
    %286 = vmatpush1.msra.mxu0 0.0
    %287 = vmatprep.subr.mxu0 0.0
    %288 = vmatpush1.msra.mxu0 0.0
    %289 = vmatprep.subr.mxu0 0.0
    %290 = vmatpush1.msra.mxu0 0.0
    %291 = vmatprep.subr.mxu0 0.0
    %292 = vmatpush1.msra.mxu0 0.0
    %293 = vmatprep.subr.mxu0 0.0
    %294 = vmatpush1.msra.mxu0 0.0
    %295 = vmatprep.subr.mxu0 0.0
    %296 = vmatpush1.msra.mxu0 0.0
    %297 = vmatprep.subr.mxu0 0.0
    %298 = vmatpush1.msra.mxu0 0.0
    %299 = vmatprep.subr.mxu0 0.0
    %300 = vmatpush1.msra.mxu0 0.0
    %301 = vmatprep.subr.mxu0 0.0
    %302 = vmatpush1.msra.mxu0 0.0
    %303 = vmatprep.subr.mxu0 0.0
    %304 = vmatpush1.msra.mxu0 0.0
    %305 = vmatprep.subr.mxu0 0.0
    %306 = vmatpush1.msra.mxu0 0.0
    %307 = vmatprep.subr.mxu0 0.0
    %308 = vmatpush1.msra.mxu0 0.0
    %309 = vmatprep.subr.mxu0 0.0
    %310 = vmatpush1.msra.mxu0 0.0
    %311 = vmatprep.subr.mxu0 0.0
    %312 = vmatpush1.msra.mxu0 0.0
    %313 = vmatprep.subr.mxu0 0.0
    %314 = vmatpush1.msra.mxu0 0.0
    %315 = vmatprep.subr.mxu0 0.0
    %316 = vmatpush1.msra.mxu0 0.0
    %317 = vmatprep.subr.mxu0 0.0
    %318 = vmatpush1.msra.mxu0 0.0
    %319 = vmatprep.mubr.f32.mxu0 0.0
    %320 = vmatmul.mubr.f32.gmra.mrb[0].mxu0 %v250
    %v321 = vpop.f32.mrb[0].mxu0
    %v322 = vadd.f32 0.0, %v321
    %v323 = vpop.f32.mrb[0].mxu0
    %324 = vmatprep.mubr.f32.mxu0 0.0
    %325 = vmatmul.mubr.f32.gmra.mrb[0].mxu0 %v253
    %v326 = vpop.f32.mrb[0].mxu0
    %v327 = vadd.f32 0.0, %v326
    %v328 = vpop.f32.mrb[0].mxu0
    %329 = vdwg.mxu0
    %v331 = vsel %vm167, %v163, 0
    %v334 = vsel %vm167, %v164, 0
    %336 = vmatprep.subr.mxu0 0.0
    %337 = vmatpush1.msra.mxu0 %v77
    %338 = vmatprep.subr.mxu0 0.0
    %339 = vmatpush1.msra.mxu0 %v78
    %340 = vmatprep.subr.mxu0 0.0
    %341 = vmatpush1.msra.mxu0 0.0
    %342 = vmatprep.subr.mxu0 0.0
    %343 = vmatpush1.msra.mxu0 0.0
    %344 = vmatprep.subr.mxu0 0.0
    %345 = vmatpush1.msra.mxu0 0.0
    %346 = vmatprep.subr.mxu0 0.0
    %347 = vmatpush1.msra.mxu0 0.0
    %348 = vmatprep.subr.mxu0 0.0
    %349 = vmatpush1.msra.mxu0 0.0
    %350 = vmatprep.subr.mxu0 0.0
    %351 = vmatpush1.msra.mxu0 0.0
    %352 = vmatprep.subr.mxu0 0.0
    %353 = vmatpush1.msra.mxu0 0.0
    %354 = vmatprep.subr.mxu0 0.0
    %355 = vmatpush1.msra.mxu0 0.0
    %356 = vmatprep.subr.mxu0 0.0
    %357 = vmatpush1.msra.mxu0 0.0
    %358 = vmatprep.subr.mxu0 0.0
    %359 = vmatpush1.msra.mxu0 0.0
    %360 = vmatprep.subr.mxu0 0.0
    %361 = vmatpush1.msra.mxu0 0.0
    %362 = vmatprep.subr.mxu0 0.0
    %363 = vmatpush1.msra.mxu0 0.0
    %364 = vmatprep.subr.mxu0 0.0
    %365 = vmatpush1.msra.mxu0 0.0
    %366 = vmatprep.subr.mxu0 0.0
    %367 = vmatpush1.msra.mxu0 0.0
    %368 = vmatprep.subr.mxu0 0.0
    %369 = vmatpush1.msra.mxu0 0.0
    %370 = vmatprep.subr.mxu0 0.0
    %371 = vmatpush1.msra.mxu0 0.0
    %372 = vmatprep.subr.mxu0 0.0
    %373 = vmatpush1.msra.mxu0 0.0
    %374 = vmatprep.subr.mxu0 0.0
    %375 = vmatpush1.msra.mxu0 0.0
    %376 = vmatprep.subr.mxu0 0.0
    %377 = vmatpush1.msra.mxu0 0.0
    %378 = vmatprep.subr.mxu0 0.0
    %379 = vmatpush1.msra.mxu0 0.0
    %380 = vmatprep.subr.mxu0 0.0
    %381 = vmatpush1.msra.mxu0 0.0
    %382 = vmatprep.subr.mxu0 0.0
    %383 = vmatpush1.msra.mxu0 0.0
    %384 = vmatprep.subr.mxu0 0.0
    %385 = vmatpush1.msra.mxu0 0.0
    %386 = vmatprep.subr.mxu0 0.0
    %387 = vmatpush1.msra.mxu0 0.0
    %388 = vmatprep.subr.mxu0 0.0
    %389 = vmatpush1.msra.mxu0 0.0
    %390 = vmatprep.subr.mxu0 0.0
    %391 = vmatpush1.msra.mxu0 0.0
    %392 = vmatprep.subr.mxu0 0.0
    %393 = vmatpush1.msra.mxu0 0.0
    %394 = vmatprep.subr.mxu0 0.0
    %395 = vmatpush1.msra.mxu0 0.0
    %396 = vmatprep.subr.mxu0 0.0
    %397 = vmatpush1.msra.mxu0 0.0
    %398 = vmatprep.subr.mxu0 0.0
    %399 = vmatpush1.msra.mxu0 0.0
    %400 = vmatprep.mubr.f32.mxu0 0.0
    %401 = vmatmul.mubr.f32.gmra.mrb[0].mxu0 %v331
    %v402 = vpop.f32.mrb[0].mxu0
    %v403 = vadd.f32 0.0, %v402
    %v404 = vpop.f32.mrb[0].mxu0
    %405 = vmatprep.mubr.f32.mxu0 0.0
    %406 = vmatmul.mubr.f32.gmra.mrb[0].mxu0 %v334
    %v407 = vpop.f32.mrb[0].mxu0
    %v408 = vadd.f32 0.0, %v407
    %v409 = vpop.f32.mrb[0].mxu0
    %410 = vdwg.mxu0
    %v412 = vsel %vm167, %v165, 0
    %v415 = vsel %vm167, %v166, 0
    %417 = vmatprep.subr.mxu0 0.0
    %418 = vmatpush1.msra.mxu0 %v77
    %419 = vmatprep.subr.mxu0 0.0
    %420 = vmatpush1.msra.mxu0 %v78
    %421 = vmatprep.subr.mxu0 0.0
    %422 = vmatpush1.msra.mxu0 0.0
    %423 = vmatprep.subr.mxu0 0.0
    %424 = vmatpush1.msra.mxu0 0.0
    %425 = vmatprep.subr.mxu0 0.0
    %426 = vmatpush1.msra.mxu0 0.0
    %427 = vmatprep.subr.mxu0 0.0
    %428 = vmatpush1.msra.mxu0 0.0
    %429 = vmatprep.subr.mxu0 0.0
    %430 = vmatpush1.msra.mxu0 0.0
    %431 = vmatprep.subr.mxu0 0.0
    %432 = vmatpush1.msra.mxu0 0.0
    %433 = vmatprep.subr.mxu0 0.0
    %434 = vmatpush1.msra.mxu0 0.0
    %435 = vmatprep.subr.mxu0 0.0
    %436 = vmatpush1.msra.mxu0 0.0
    %437 = vmatprep.subr.mxu0 0.0
    %438 = vmatpush1.msra.mxu0 0.0
    %439 = vmatprep.subr.mxu0 0.0
    %440 = vmatpush1.msra.mxu0 0.0
    %441 = vmatprep.subr.mxu0 0.0
    %442 = vmatpush1.msra.mxu0 0.0
    %443 = vmatprep.subr.mxu0 0.0
    %444 = vmatpush1.msra.mxu0 0.0
    %445 = vmatprep.subr.mxu0 0.0
    %446 = vmatpush1.msra.mxu0 0.0
    %447 = vmatprep.subr.mxu0 0.0
    %448 = vmatpush1.msra.mxu0 0.0
    %449 = vmatprep.subr.mxu0 0.0
    %450 = vmatpush1.msra.mxu0 0.0
    %451 = vmatprep.subr.mxu0 0.0
    %452 = vmatpush1.msra.mxu0 0.0
    %453 = vmatprep.subr.mxu0 0.0
    %454 = vmatpush1.msra.mxu0 0.0
    %455 = vmatprep.subr.mxu0 0.0
    %456 = vmatpush1.msra.mxu0 0.0
    %457 = vmatprep.subr.mxu0 0.0
    %458 = vmatpush1.msra.mxu0 0.0
    %459 = vmatprep.subr.mxu0 0.0
    %460 = vmatpush1.msra.mxu0 0.0
    %461 = vmatprep.subr.mxu0 0.0
    %462 = vmatpush1.msra.mxu0 0.0
    %463 = vmatprep.subr.mxu0 0.0
    %464 = vmatpush1.msra.mxu0 0.0
    %465 = vmatprep.subr.mxu0 0.0
    %466 = vmatpush1.msra.mxu0 0.0
    %467 = vmatprep.subr.mxu0 0.0
    %468 = vmatpush1.msra.mxu0 0.0
    %469 = vmatprep.subr.mxu0 0.0
    %470 = vmatpush1.msra.mxu0 0.0
    %471 = vmatprep.subr.mxu0 0.0
    %472 = vmatpush1.msra.mxu0 0.0
    %473 = vmatprep.subr.mxu0 0.0
    %474 = vmatpush1.msra.mxu0 0.0
    %475 = vmatprep.subr.mxu0 0.0
    %476 = vmatpush1.msra.mxu0 0.0
    %477 = vmatprep.subr.mxu0 0.0
    %478 = vmatpush1.msra.mxu0 0.0
    %479 = vmatprep.subr.mxu0 0.0
    %480 = vmatpush1.msra.mxu0 0.0
    %481 = vmatprep.mubr.f32.mxu0 0.0
    %482 = vmatmul.mubr.f32.gmra.mrb[0].mxu0 %v412
    %v483 = vpop.f32.mrb[0].mxu0
    %v484 = vadd.f32 0.0, %v483
    %v485 = vpop.f32.mrb[0].mxu0
    %486 = vmatprep.mubr.f32.mxu0 0.0
    %487 = vmatmul.mubr.f32.gmra.mrb[0].mxu0 %v415
    %v488 = vpop.f32.mrb[0].mxu0
    %v489 = vadd.f32 0.0, %v488
    %v490 = vpop.f32.mrb[0].mxu0
    %491 = vdwg.mxu0
    %v492 = vand.u32 %v56, 8
    %v493 = vand.u32 %v59, 8
    %v494 = vand.u32 %v62, 8
    %v495 = vand.u32 %v65, 8
    %vm496 = vcmp.ne.s32.totalorder %v492, 0
    %vm497 = vcmp.ne.s32.totalorder %v493, 0
    %vm498 = vcmp.ne.s32.totalorder %v494, 0
    %vm499 = vcmp.ne.s32.totalorder %v495, 0
    %v500 = vsel %vm496, %v241, %v159
    %v501 = vsel %vm496, %v246, %v160
    %v502 = vsel %vm497, %v322, %v161
    %v503 = vsel %vm497, %v327, %v162
    %v504 = vsel %vm498, %v403, %v163
    %v505 = vsel %vm498, %v408, %v164
    %v506 = vsel %vm499, %v484, %v165
    %v507 = vsel %vm499, %v489, %v166
    %v509 = vsel %vm167, %v77, 0
    %v512 = vsel %vm167, %v78, 0
    %514 = vmatprep.subr.mxu0 0.0
    %515 = vmatpush1.msra.mxu0 %v500
    %516 = vmatprep.subr.mxu0 0.0
    %517 = vmatpush1.msra.mxu0 %v501
    %518 = vmatprep.subr.mxu0 0.0
    %519 = vmatpush1.msra.mxu0 0.0
    %520 = vmatprep.subr.mxu0 0.0
    %521 = vmatpush1.msra.mxu0 0.0
    %522 = vmatprep.subr.mxu0 0.0
    %523 = vmatpush1.msra.mxu0 0.0
    %524 = vmatprep.subr.mxu0 0.0
    %525 = vmatpush1.msra.mxu0 0.0
    %526 = vmatprep.subr.mxu0 0.0
    %527 = vmatpush1.msra.mxu0 0.0
    %528 = vmatprep.subr.mxu0 0.0
    %529 = vmatpush1.msra.mxu0 0.0
    %530 = vmatprep.subr.mxu0 0.0
    %531 = vmatpush1.msra.mxu0 0.0
    %532 = vmatprep.subr.mxu0 0.0
    %533 = vmatpush1.msra.mxu0 0.0
    %534 = vmatprep.subr.mxu0 0.0
    %535 = vmatpush1.msra.mxu0 0.0
    %536 = vmatprep.subr.mxu0 0.0
    %537 = vmatpush1.msra.mxu0 0.0
    %538 = vmatprep.subr.mxu0 0.0
    %539 = vmatpush1.msra.mxu0 0.0
    %540 = vmatprep.subr.mxu0 0.0
    %541 = vmatpush1.msra.mxu0 0.0
    %542 = vmatprep.subr.mxu0 0.0
    %543 = vmatpush1.msra.mxu0 0.0
    %544 = vmatprep.subr.mxu0 0.0
    %545 = vmatpush1.msra.mxu0 0.0
    %546 = vmatprep.subr.mxu0 0.0
    %547 = vmatpush1.msra.mxu0 0.0
    %548 = vmatprep.subr.mxu0 0.0
    %549 = vmatpush1.msra.mxu0 0.0
    %550 = vmatprep.subr.mxu0 0.0
    %551 = vmatpush1.msra.mxu0 0.0
    %552 = vmatprep.subr.mxu0 0.0
    %553 = vmatpush1.msra.mxu0 0.0
    %554 = vmatprep.subr.mxu0 0.0
    %555 = vmatpush1.msra.mxu0 0.0
    %556 = vmatprep.subr.mxu0 0.0
    %557 = vmatpush1.msra.mxu0 0.0
    %558 = vmatprep.subr.mxu0 0.0
    %559 = vmatpush1.msra.mxu0 0.0
    %560 = vmatprep.subr.mxu0 0.0
    %561 = vmatpush1.msra.mxu0 0.0
    %562 = vmatprep.subr.mxu0 0.0
    %563 = vmatpush1.msra.mxu0 0.0
    %564 = vmatprep.subr.mxu0 0.0
    %565 = vmatpush1.msra.mxu0 0.0
    %566 = vmatprep.subr.mxu0 0.0
    %567 = vmatpush1.msra.mxu0 0.0
    %568 = vmatprep.subr.mxu0 0.0
    %569 = vmatpush1.msra.mxu0 0.0
    %570 = vmatprep.subr.mxu0 0.0
    %571 = vmatpush1.msra.mxu0 0.0
    %572 = vmatprep.subr.mxu0 0.0
    %573 = vmatpush1.msra.mxu0 0.0
    %574 = vmatprep.subr.mxu0 0.0
    %575 = vmatpush1.msra.mxu0 0.0
    %576 = vmatprep.subr.mxu0 0.0
    %577 = vmatpush1.msra.mxu0 0.0
    %578 = vmatprep.mubr.f32.mxu0 0.0
    %579 = vmatmul.mubr.f32.gmra.mrb[0].mxu0 %v509
    %v580 = vpop.f32.mrb[0].mxu0
    %v581 = vadd.f32 0.0, %v580
    %v582 = vpop.f32.mrb[0].mxu0
    %583 = vmatprep.mubr.f32.mxu0 0.0
    %584 = vmatmul.mubr.f32.gmra.mrb[0].mxu0 %v512
    %v585 = vpop.f32.mrb[0].mxu0
    %v586 = vadd.f32 0.0, %v585
    %v587 = vpop.f32.mrb[0].mxu0
    %588 = vdwg.mxu0
    %589 = vmatprep.subr.mxu0 0.0
    %590 = vmatpush1.msra.mxu0 %v502
    %591 = vmatprep.subr.mxu0 0.0
    %592 = vmatpush1.msra.mxu0 %v503
    %593 = vmatprep.subr.mxu0 0.0
    %594 = vmatpush1.msra.mxu0 0.0
    %595 = vmatprep.subr.mxu0 0.0
    %596 = vmatpush1.msra.mxu0 0.0
    %597 = vmatprep.subr.mxu0 0.0
    %598 = vmatpush1.msra.mxu0 0.0
    %599 = vmatprep.subr.mxu0 0.0
    %600 = vmatpush1.msra.mxu0 0.0
    %601 = vmatprep.subr.mxu0 0.0
    %602 = vmatpush1.msra.mxu0 0.0
    %603 = vmatprep.subr.mxu0 0.0
    %604 = vmatpush1.msra.mxu0 0.0
    %605 = vmatprep.subr.mxu0 0.0
    %606 = vmatpush1.msra.mxu0 0.0
    %607 = vmatprep.subr.mxu0 0.0
    %608 = vmatpush1.msra.mxu0 0.0
    %609 = vmatprep.subr.mxu0 0.0
    %610 = vmatpush1.msra.mxu0 0.0
    %611 = vmatprep.subr.mxu0 0.0
    %612 = vmatpush1.msra.mxu0 0.0
    %613 = vmatprep.subr.mxu0 0.0
    %614 = vmatpush1.msra.mxu0 0.0
    %615 = vmatprep.subr.mxu0 0.0
    %616 = vmatpush1.msra.mxu0 0.0
    %617 = vmatprep.subr.mxu0 0.0
    %618 = vmatpush1.msra.mxu0 0.0
    %619 = vmatprep.subr.mxu0 0.0
    %620 = vmatpush1.msra.mxu0 0.0
    %621 = vmatprep.subr.mxu0 0.0
    %622 = vmatpush1.msra.mxu0 0.0
    %623 = vmatprep.subr.mxu0 0.0
    %624 = vmatpush1.msra.mxu0 0.0
    %625 = vmatprep.subr.mxu0 0.0
    %626 = vmatpush1.msra.mxu0 0.0
    %627 = vmatprep.subr.mxu0 0.0
    %628 = vmatpush1.msra.mxu0 0.0
    %629 = vmatprep.subr.mxu0 0.0
    %630 = vmatpush1.msra.mxu0 0.0
    %631 = vmatprep.subr.mxu0 0.0
    %632 = vmatpush1.msra.mxu0 0.0
    %633 = vmatprep.subr.mxu0 0.0
    %634 = vmatpush1.msra.mxu0 0.0
    %635 = vmatprep.subr.mxu0 0.0
    %636 = vmatpush1.msra.mxu0 0.0
    %637 = vmatprep.subr.mxu0 0.0
    %638 = vmatpush1.msra.mxu0 0.0
    %639 = vmatprep.subr.mxu0 0.0
    %640 = vmatpush1.msra.mxu0 0.0
    %641 = vmatprep.subr.mxu0 0.0
    %642 = vmatpush1.msra.mxu0 0.0
    %643 = vmatprep.subr.mxu0 0.0
    %644 = vmatpush1.msra.mxu0 0.0
    %645 = vmatprep.subr.mxu0 0.0
    %646 = vmatpush1.msra.mxu0 0.0
    %647 = vmatprep.subr.mxu0 0.0
    %648 = vmatpush1.msra.mxu0 0.0
    %649 = vmatprep.subr.mxu0 0.0
    %650 = vmatpush1.msra.mxu0 0.0
    %651 = vmatprep.subr.mxu0 0.0
    %652 = vmatpush1.msra.mxu0 0.0
    %653 = vmatprep.mubr.f32.mxu0 0.0
    %654 = vmatmul.mubr.f32.gmra.mrb[0].mxu0 %v509
    %v655 = vpop.f32.mrb[0].mxu0
    %v656 = vadd.f32 0.0, %v655
    %v657 = vpop.f32.mrb[0].mxu0
    %658 = vmatprep.mubr.f32.mxu0 0.0
    %659 = vmatmul.mubr.f32.gmra.mrb[0].mxu0 %v512
    %v660 = vpop.f32.mrb[0].mxu0
    %v661 = vadd.f32 0.0, %v660
    %v662 = vpop.f32.mrb[0].mxu0
    %663 = vdwg.mxu0
    %664 = vmatprep.subr.mxu0 0.0
    %665 = vmatpush1.msra.mxu0 %v504
    %666 = vmatprep.subr.mxu0 0.0
    %667 = vmatpush1.msra.mxu0 %v505
    %668 = vmatprep.subr.mxu0 0.0
    %669 = vmatpush1.msra.mxu0 0.0
    %670 = vmatprep.subr.mxu0 0.0
    %671 = vmatpush1.msra.mxu0 0.0
    %672 = vmatprep.subr.mxu0 0.0
    %673 = vmatpush1.msra.mxu0 0.0
    %674 = vmatprep.subr.mxu0 0.0
    %675 = vmatpush1.msra.mxu0 0.0
    %676 = vmatprep.subr.mxu0 0.0
    %677 = vmatpush1.msra.mxu0 0.0
    %678 = vmatprep.subr.mxu0 0.0
    %679 = vmatpush1.msra.mxu0 0.0
    %680 = vmatprep.subr.mxu0 0.0
    %681 = vmatpush1.msra.mxu0 0.0
    %682 = vmatprep.subr.mxu0 0.0
    %683 = vmatpush1.msra.mxu0 0.0
    %684 = vmatprep.subr.mxu0 0.0
    %685 = vmatpush1.msra.mxu0 0.0
    %686 = vmatprep.subr.mxu0 0.0
    %687 = vmatpush1.msra.mxu0 0.0
    %688 = vmatprep.subr.mxu0 0.0
    %689 = vmatpush1.msra.mxu0 0.0
    %690 = vmatprep.subr.mxu0 0.0
    %691 = vmatpush1.msra.mxu0 0.0
    %692 = vmatprep.subr.mxu0 0.0
    %693 = vmatpush1.msra.mxu0 0.0
    %694 = vmatprep.subr.mxu0 0.0
    %695 = vmatpush1.msra.mxu0 0.0
    %696 = vmatprep.subr.mxu0 0.0
    %697 = vmatpush1.msra.mxu0 0.0
    %698 = vmatprep.subr.mxu0 0.0
    %699 = vmatpush1.msra.mxu0 0.0
    %700 = vmatprep.subr.mxu0 0.0
    %701 = vmatpush1.msra.mxu0 0.0
    %702 = vmatprep.subr.mxu0 0.0
    %703 = vmatpush1.msra.mxu0 0.0
    %704 = vmatprep.subr.mxu0 0.0
    %705 = vmatpush1.msra.mxu0 0.0
    %706 = vmatprep.subr.mxu0 0.0
    %707 = vmatpush1.msra.mxu0 0.0
    %708 = vmatprep.subr.mxu0 0.0
    %709 = vmatpush1.msra.mxu0 0.0
    %710 = vmatprep.subr.mxu0 0.0
    %711 = vmatpush1.msra.mxu0 0.0
    %712 = vmatprep.subr.mxu0 0.0
    %713 = vmatpush1.msra.mxu0 0.0
    %714 = vmatprep.subr.mxu0 0.0
    %715 = vmatpush1.msra.mxu0 0.0
    %716 = vmatprep.subr.mxu0 0.0
    %717 = vmatpush1.msra.mxu0 0.0
    %718 = vmatprep.subr.mxu0 0.0
    %719 = vmatpush1.msra.mxu0 0.0
    %720 = vmatprep.subr.mxu0 0.0
    %721 = vmatpush1.msra.mxu0 0.0
    %722 = vmatprep.subr.mxu0 0.0
    %723 = vmatpush1.msra.mxu0 0.0
    %724 = vmatprep.subr.mxu0 0.0
    %725 = vmatpush1.msra.mxu0 0.0
    %726 = vmatprep.subr.mxu0 0.0
    %727 = vmatpush1.msra.mxu0 0.0
    %728 = vmatprep.mubr.f32.mxu0 0.0
    %729 = vmatmul.mubr.f32.gmra.mrb[0].mxu0 %v509
    %v730 = vpop.f32.mrb[0].mxu0
    %v731 = vadd.f32 0.0, %v730
    %v732 = vpop.f32.mrb[0].mxu0
    %733 = vmatprep.mubr.f32.mxu0 0.0
    %734 = vmatmul.mubr.f32.gmra.mrb[0].mxu0 %v512
    %v735 = vpop.f32.mrb[0].mxu0
    %v736 = vadd.f32 0.0, %v735
    %v737 = vpop.f32.mrb[0].mxu0
    %738 = vdwg.mxu0
    %739 = vmatprep.subr.mxu0 0.0
    %740 = vmatpush1.msra.mxu0 %v506
    %741 = vmatprep.subr.mxu0 0.0
    %742 = vmatpush1.msra.mxu0 %v507
    %743 = vmatprep.subr.mxu0 0.0
    %744 = vmatpush1.msra.mxu0 0.0
    %745 = vmatprep.subr.mxu0 0.0
    %746 = vmatpush1.msra.mxu0 0.0
    %747 = vmatprep.subr.mxu0 0.0
    %748 = vmatpush1.msra.mxu0 0.0
    %749 = vmatprep.subr.mxu0 0.0
    %750 = vmatpush1.msra.mxu0 0.0
    %751 = vmatprep.subr.mxu0 0.0
    %752 = vmatpush1.msra.mxu0 0.0
    %753 = vmatprep.subr.mxu0 0.0
    %754 = vmatpush1.msra.mxu0 0.0
    %755 = vmatprep.subr.mxu0 0.0
    %756 = vmatpush1.msra.mxu0 0.0
    %757 = vmatprep.subr.mxu0 0.0
    %758 = vmatpush1.msra.mxu0 0.0
    %759 = vmatprep.subr.mxu0 0.0
    %760 = vmatpush1.msra.mxu0 0.0
    %761 = vmatprep.subr.mxu0 0.0
    %762 = vmatpush1.msra.mxu0 0.0
    %763 = vmatprep.subr.mxu0 0.0
    %764 = vmatpush1.msra.mxu0 0.0
    %765 = vmatprep.subr.mxu0 0.0
    %766 = vmatpush1.msra.mxu0 0.0
    %767 = vmatprep.subr.mxu0 0.0
    %768 = vmatpush1.msra.mxu0 0.0
    %769 = vmatprep.subr.mxu0 0.0
    %770 = vmatpush1.msra.mxu0 0.0
    %771 = vmatprep.subr.mxu0 0.0
    %772 = vmatpush1.msra.mxu0 0.0
    %773 = vmatprep.subr.mxu0 0.0
    %774 = vmatpush1.msra.mxu0 0.0
    %775 = vmatprep.subr.mxu0 0.0
    %776 = vmatpush1.msra.mxu0 0.0
    %777 = vmatprep.subr.mxu0 0.0
    %778 = vmatpush1.msra.mxu0 0.0
    %779 = vmatprep.subr.mxu0 0.0
    %780 = vmatpush1.msra.mxu0 0.0
    %781 = vmatprep.subr.mxu0 0.0
    %782 = vmatpush1.msra.mxu0 0.0
    %783 = vmatprep.subr.mxu0 0.0
    %784 = vmatpush1.msra.mxu0 0.0
    %785 = vmatprep.subr.mxu0 0.0
    %786 = vmatpush1.msra.mxu0 0.0
    %787 = vmatprep.subr.mxu0 0.0
    %788 = vmatpush1.msra.mxu0 0.0
    %789 = vmatprep.subr.mxu0 0.0
    %790 = vmatpush1.msra.mxu0 0.0
    %791 = vmatprep.subr.mxu0 0.0
    %792 = vmatpush1.msra.mxu0 0.0
    %793 = vmatprep.subr.mxu0 0.0
    %794 = vmatpush1.msra.mxu0 0.0
    %795 = vmatprep.subr.mxu0 0.0
    %796 = vmatpush1.msra.mxu0 0.0
    %797 = vmatprep.subr.mxu0 0.0
    %798 = vmatpush1.msra.mxu0 0.0
    %799 = vmatprep.subr.mxu0 0.0
    %800 = vmatpush1.msra.mxu0 0.0
    %801 = vmatprep.subr.mxu0 0.0
    %802 = vmatpush1.msra.mxu0 0.0
    %803 = vmatprep.mubr.f32.mxu0 0.0
    %804 = vmatmul.mubr.f32.gmra.mrb[0].mxu0 %v509
    %v805 = vpop.f32.mrb[0].mxu0
    %v806 = vadd.f32 0.0, %v805
    %v807 = vpop.f32.mrb[0].mxu0
    %808 = vmatprep.mubr.f32.mxu0 0.0
    %809 = vmatmul.mubr.f32.gmra.mrb[0].mxu0 %v512
    %v810 = vpop.f32.mrb[0].mxu0
    %v811 = vadd.f32 0.0, %v810
    %v812 = vpop.f32.mrb[0].mxu0
    %813 = vdwg.mxu0
    %v814 = vand.u32 %v56, 16
    %v815 = vand.u32 %v59, 16
    %v816 = vand.u32 %v62, 16
    %v817 = vand.u32 %v65, 16
    %vm818 = vcmp.ne.s32.totalorder %v814, 0
    %vm819 = vcmp.ne.s32.totalorder %v815, 0
    %vm820 = vcmp.ne.s32.totalorder %v816, 0
    %vm821 = vcmp.ne.s32.totalorder %v817, 0
    %v822 = vsel %vm818, %v581, %v500
    %v823 = vsel %vm818, %v586, %v501
    %v824 = vsel %vm819, %v656, %v502
    %v825 = vsel %vm819, %v661, %v503
    %v826 = vsel %vm820, %v731, %v504
    %v827 = vsel %vm820, %v736, %v505
    %v828 = vsel %vm821, %v806, %v506
    %v829 = vsel %vm821, %v811, %v507
    %v830 = vmul.f32 %v822, 0.0
    %v831 = vmul.f32 %v823, 0.0
    %v832 = vmul.f32 %v824, 0.0
    %v833 = vmul.f32 %v825, 0.0
    %v834 = vmul.f32 %v826, 0.0
    %v835 = vmul.f32 %v827, 0.0
    %v836 = vmul.f32 %v828, 0.0
    %v837 = vmul.f32 %v829, 0.0
    %v838 = vand.u32 %v56, 32
    %v839 = vand.u32 %v59, 32
    %v840 = vand.u32 %v62, 32
    %v841 = vand.u32 %v65, 32
    %vm842 = vcmp.ne.s32.totalorder %v838, 0
    %vm843 = vcmp.ne.s32.totalorder %v839, 0
    %vm844 = vcmp.ne.s32.totalorder %v840, 0
    %vm845 = vcmp.ne.s32.totalorder %v841, 0
    %v846 = vsel %vm842, %v830, %v822
    %v847 = vsel %vm842, %v831, %v823
    %v848 = vsel %vm843, %v832, %v824
    %v849 = vsel %vm843, %v833, %v825
    %v850 = vsel %vm844, %v834, %v826
    %v851 = vsel %vm844, %v835, %v827
    %v852 = vsel %vm845, %v836, %v828
    %v853 = vsel %vm845, %v837, %v829
    %854 = vst.msk [vmem:[#allocation5] sm:$0xff] %vm167, %v846
    %855 = vst.msk [vmem:[#allocation5 + $0x8] sm:$0xff] %vm167, %v847
    %856 = vst.msk [vmem:[#allocation5 + $0x10] sm:$0xff] %vm167, %v848
    %857 = vst.msk [vmem:[#allocation5 + $0x18] sm:$0xff] %vm167, %v849
    %858 = vst.msk [vmem:[#allocation5 + $0x20] sm:$0xff] %vm167, %v850
    %859 = vst.msk [vmem:[#allocation5 + $0x28] sm:$0xff] %vm167, %v851
    %860 = vst.msk [vmem:[#allocation5 + $0x30] sm:$0xff] %vm167, %v852
    %861 = vst.msk [vmem:[#allocation5 + $0x38] sm:$0xff] %vm167, %v853
    // Predicated region
    $region14: #{tpu_custom_call.1} parent=1 // pred_check
      _
    $region15: #{tpu_custom_call.1} parent=1 // pred_check_branch
      %863 = sbr.rel (0) target = $region17
    $region16: #{tpu_custom_call.1} parent=1 // pred_region
      %s865 = ssub.s32 1024, 1024
      %866 = vsyncadd [#allocation4], %s865
      %s867 = sshll.u32 [#allocation5], 4
      %s868 = int_to_ptr.vmem [resolvable:$true] %s867
      %873 = dma.vmem_to_hbm [thread:$0]  %s868, 1024, %s2, [#allocation4], 128, 128, 8
    $region17: #{tpu_custom_call.1} parent=1 // pred_fallthru
      _
    // Predicated region
    $region18: #{tpu_custom_call.1} parent=1 // pred_check
      _
    $region19: #{tpu_custom_call.1} parent=1 // pred_check_branch
      %875 = sbr.rel (0) target = $region21
    $region20: #{tpu_custom_call.1} parent=1 // pred_region
      %876 = dma.done [#allocation4], 1024
    $region21: #{tpu_custom_call.1} parent=1 // pred_fallthru
      _
    %877 = vsyncpa [#allocation3], 1
    %878 = vsyncpa [#allocation4], 1

</llo_original>
